<compile_context>
chip_gen: v7x
topology: tpu7x:2x2x1
jax: 0.10.0
libtpu: 0.0.40
codegen_flags: <defaults>
</compile_context>

<pallas_src>
import numpy as np
import jax
import jax.numpy as jnp
from jax.experimental import pallas as pl
from jax.experimental.pallas import tpu as pltpu

SAMPLE_RATE = 16000
N_MELS = 80
FRAME_LEN_MS = 25
FRAME_SHIFT_MS = 10
WINDOW_SIZE = SAMPLE_RATE * FRAME_LEN_MS // 1000      # 400
WINDOW_SHIFT = SAMPLE_RATE * FRAME_SHIFT_MS // 1000   # 160
PADDED_WINDOW = 512                                   # next pow2 of 400 (FFT length)
FREQ_PAD = PADDED_WINDOW // 2                         # 256 bins (Nyquist bin has 0 mel weight)
OUT_PAD = 128                                         # lane-dense output width (>= 80)
PREEMPH = 0.97
LOW_FREQ = 20.0
HIGH_FREQ = SAMPLE_RATE / 2.0                         # kaldi high_freq=0 -> +nyquist
EPS = float(np.finfo(np.float32).eps)                 # torchaudio EPSILON
MAX_TM = 1024                                         # frames per grid step (cap)
TM_ALIGN = 16                                         # bf16 sublane packing for the frame tile


def _round_up(x, m):
    return ((x + m - 1) // m) * m


# ----------------------------- constant tables (float64 numpy glue) -----------------------------

def _povey_window():
    n = np.arange(WINDOW_SIZE, dtype=np.float64)
    return (0.5 - 0.5 * np.cos(2.0 * np.pi * n / (WINDOW_SIZE - 1))) ** 0.85


def _preproc_matrix():
    """Linear operator (400,400): column-vector x -> windowed(preemph(dc_removed(x)))."""
    n = WINDOW_SIZE
    t_dc = np.eye(n, dtype=np.float64) - np.ones((n, n), dtype=np.float64) / n
    t_pre = np.eye(n, dtype=np.float64)
    t_pre[np.arange(1, n), np.arange(0, n - 1)] = -PREEMPH
    t_pre[0, 0] = 1.0 - PREEMPH                        # replicate-left boundary
    win = _povey_window()
    return (win[:, None] * t_pre) @ t_dc               # diag(win) @ P @ D


def _dft_cos_sin():
    """Two (400, 256) f32 matrices: cos / sin DFT (N=512) with the whole linear preprocessing
    chain folded in (composed in float64). No zero-padded sample rows needed."""
    t = _preproc_matrix()                              # (400, 400)
    n = np.arange(WINDOW_SIZE, dtype=np.float64)[:, None]
    k = np.arange(FREQ_PAD, dtype=np.float64)[None, :]
    ang = 2.0 * np.pi * n * k / PADDED_WINDOW          # (400, 256)
    cos_c = t.T @ np.cos(ang)                          # (400, 256)
    sin_c = t.T @ np.sin(ang)
    return cos_c.astype(np.float32), sin_c.astype(np.float32)


def _mel_banks():
    """torchaudio.compliance.kaldi.get_mel_banks (no vtln warp): (80, 256) float64."""
    def mel_scale(f):
        return 1127.0 * np.log(1.0 + f / 700.0)

    num_fft_bins = PADDED_WINDOW // 2                  # 256
    fft_bin_width = SAMPLE_RATE / PADDED_WINDOW
    mel_low = mel_scale(LOW_FREQ)
    mel_high = mel_scale(HIGH_FREQ)
    mel_delta = (mel_high - mel_low) / (N_MELS + 1)

    b = np.arange(N_MELS, dtype=np.float64)[:, None]
    left_mel = mel_low + b * mel_delta
    center_mel = mel_low + (b + 1.0) * mel_delta
    right_mel = mel_low + (b + 2.0) * mel_delta

    mel = mel_scale(fft_bin_width * np.arange(num_fft_bins, dtype=np.float64))[None, :]
    up = (mel - left_mel) / (center_mel - left_mel)
    down = (right_mel - mel) / (right_mel - center_mel)
    return np.maximum(0.0, np.minimum(up, down))       # (80, 256)


def _mel_matrix_padded():
    """(256, 128) f32: mel bank transposed, lane-padded with zero columns 80..127."""
    m = np.zeros((FREQ_PAD, OUT_PAD), dtype=np.float64)
    m[:, :N_MELS] = _mel_banks().T
    return m.astype(np.float32)


# ----------------------------------- Pallas kernel -----------------------------------

def _fbank_kernel(frames_ref, cos_ref, sin_ref, mel_ref, out_ref):
    x = frames_ref[...]                                                    # (TM, 400) bf16
    re = jnp.dot(x, cos_ref[...], preferred_element_type=jnp.float32)      # (TM, 256) f32
    im = jnp.dot(x, sin_ref[...], preferred_element_type=jnp.float32)      # (TM, 256) f32
    power = re * re + im * im                                              # f32 (VPU)
    mel = jnp.dot(power, mel_ref[...], preferred_element_type=jnp.float32) # (TM, 128) f32
    out_ref[...] = jnp.log(jnp.maximum(mel, EPS))


def kaldi_fbank(speech):
    """speech: (channels, num_samples) float32 -> (num_frames, 80) float32."""
    wav = speech[0].astype(jnp.float32)
    num_samples = wav.shape[0]
    if num_samples < WINDOW_SIZE:
        raise ValueError(f"need at least {WINDOW_SIZE} samples, got {num_samples}")
    num_frames = 1 + (num_samples - WINDOW_SIZE) // WINDOW_SHIFT

    # Tile size: large to amortize per-step pipeline overhead; keep >=2 balanced grid steps
    # when possible so both v7x TensorCores get work on the "parallel" axis.
    half = -(-num_frames // 2)                                  # cdiv(num_frames, 2)
    tm = min(MAX_TM, max(TM_ALIGN, _round_up(half, TM_ALIGN)))
    nf_pad = _round_up(num_frames, tm)

    # Framing (snip_edges=True) from contiguous 160-sample chunk slices (no gather HLO):
    #   frame i = wav[i*160 : i*160 + 400] = [chunk i | chunk i+1 | chunk i+2[:80]]
    # TODO(synk): an in-kernel DMA framing path (memory_space=pl.ANY on the raw wav + per-step
    # slab copy) would also remove this 2.5x framed HBM copy entirely.
    wav16 = wav.astype(jnp.bfloat16)
    num_chunks = num_frames + 2
    total = num_chunks * WINDOW_SHIFT
    if total > num_samples:
        wav16 = jnp.pad(wav16, (0, total - num_samples))
    chunks = wav16[:total].reshape(num_chunks, WINDOW_SHIFT)
    tail = WINDOW_SIZE - 2 * WINDOW_SHIFT                       # 80
    frames = jnp.concatenate(
        [chunks[:num_frames],
         chunks[1:num_frames + 1],
         chunks[2:num_frames + 2, :tail]], axis=-1)             # (num_frames, 400) bf16
    frames = jnp.pad(frames, ((0, nf_pad - num_frames), (0, 0)))

    cos_np, sin_np = _dft_cos_sin()
    cos_m = jnp.asarray(cos_np, dtype=jnp.bfloat16)             # (400, 256) bf16
    sin_m = jnp.asarray(sin_np, dtype=jnp.bfloat16)             # (400, 256) bf16
    mel_m = jnp.asarray(_mel_matrix_padded())                   # (256, 128) f32

    out = pl.pallas_call(
        _fbank_kernel,
        out_shape=jax.ShapeDtypeStruct((nf_pad, OUT_PAD), jnp.float32),
        grid_spec=pltpu.PrefetchScalarGridSpec(
            num_scalar_prefetch=0,
            grid=(nf_pad // tm,),
            in_specs=[
                pl.BlockSpec((tm, WINDOW_SIZE), lambda i: (i, 0)),
                pl.BlockSpec((WINDOW_SIZE, FREQ_PAD), lambda i: (0, 0)),
                pl.BlockSpec((WINDOW_SIZE, FREQ_PAD), lambda i: (0, 0)),
                pl.BlockSpec((FREQ_PAD, OUT_PAD), lambda i: (0, 0)),
            ],
            out_specs=pl.BlockSpec((tm, OUT_PAD), lambda i: (i, 0)),
        ),
        compiler_params=pltpu.CompilerParams(dimension_semantics=("parallel",)),
    )(frames, cos_m, sin_m, mel_m)

    return out[:num_frames, :N_MELS]


# ----------------------------------- reference (numpy, float64) -----------------------------------

def _ref_fbank(speech_np):
    wav = np.asarray(speech_np, dtype=np.float64)[0]
    num_frames = 1 + (wav.shape[0] - WINDOW_SIZE) // WINDOW_SHIFT
    idx = np.arange(num_frames)[:, None] * WINDOW_SHIFT + np.arange(WINDOW_SIZE)[None, :]
    fr = wav[idx]
    fr = fr - fr.mean(axis=-1, keepdims=True)
    prev = np.concatenate([fr[:, :1], fr[:, :-1]], axis=-1)
    fr = fr - PREEMPH * prev
    fr = fr * _povey_window()
    fr = np.pad(fr, ((0, 0), (0, PADDED_WINDOW - WINDOW_SIZE)))
    spec = np.abs(np.fft.rfft(fr, axis=-1)) ** 2                       # (m, 257)
    # Nyquist bin (index 256) gets zero mel weight in torchaudio's kaldi fbank.
    mel = spec[:, :FREQ_PAD] @ _mel_banks().T                          # (m, 80)
    return np.log(np.maximum(mel, EPS))


if __name__ == "__main__":
    key = jax.random.PRNGKey(0)
    num_samples = WINDOW_SIZE + WINDOW_SHIFT * 7                       # -> 8 frames (small)
    speech = jax.random.normal(key, (1, num_samples), dtype=jnp.float32)

    out = jax.block_until_ready(kaldi_fbank(speech))
    assert out.shape == (8, N_MELS) and out.dtype == jnp.float32

    ref = _ref_fbank(np.asarray(speech))
    err = np.abs(np.asarray(out, dtype=np.float64) - ref)
    # bf16 DFT operands: typical |log-mel| error is a few 1e-3; the worst-case entry is
    # dominated by near-null low-frequency bins where a ~0.3% absolute spectral error becomes
    # a large relative (hence log) one, so the max-error bound is intentionally looser.
    assert err.mean() < 1e-2, f"mean err {err.mean():.3e}"
    assert err.max() < 2e-1, f"max err {err.max():.3e}"

    print("KERNEL_OK")
</pallas_src>

<mosaic_0001>
module attributes {stable_mosaic.version = 11 : i64} {
  func.func @_fbank_kernel(%arg0: i32, %arg1: memref<16x400xbf16, #tpu.memory_space<vmem>>, %arg2: memref<400x256xbf16, #tpu.memory_space<vmem>>, %arg3: memref<400x256xbf16, #tpu.memory_space<vmem>>, %arg4: memref<256x128xf32, #tpu.memory_space<vmem>>, %arg5: memref<16x128xf32, #tpu.memory_space<vmem>>) attributes {dimension_semantics = [#tpu.dimension_semantics<parallel>], iteration_bounds = array<i64: 1>, scalar_prefetch = 0 : i64, scratch_operands = 0 : i64, tpu.core_type = #tpu.core_type<tc>, window_params = [{transform_indices = @transform_0, window_bounds = array<i64: 16, 400>}, {pipeline_mode = #tpu.pipeline_mode<synchronous>, transform_indices = @transform_1, window_bounds = array<i64: 400, 256>}, {pipeline_mode = #tpu.pipeline_mode<synchronous>, transform_indices = @transform_2, window_bounds = array<i64: 400, 256>}, {pipeline_mode = #tpu.pipeline_mode<synchronous>, transform_indices = @transform_3, window_bounds = array<i64: 256, 128>}, {transform_indices = @transform_4, window_bounds = array<i64: 16, 128>}]} {
    %c0 = arith.constant 0 : index
    %c0_0 = arith.constant 0 : index
    %0 = vector.load %arg1[%c0, %c0_0] : memref<16x400xbf16, #tpu.memory_space<vmem>>, vector<16x400xbf16>
    %c0_1 = arith.constant 0 : index
    %c0_2 = arith.constant 0 : index
    %1 = vector.load %arg2[%c0_1, %c0_2] : memref<400x256xbf16, #tpu.memory_space<vmem>>, vector<400x256xbf16>
    %cst = arith.constant dense<0.000000e+00> : vector<16x256xf32>
    %2 = tpu.matmul %0, %1, %cst {dimension_numbers = #tpu.dot_dimension_numbers<[1], [0], [0], [1], [0, 0, 1, 1], [], []>} : vector<16x400xbf16>, vector<400x256xbf16>, vector<16x256xf32> -> vector<16x256xf32>
    %c0_3 = arith.constant 0 : index
    %c0_4 = arith.constant 0 : index
    %3 = vector.load %arg3[%c0_3, %c0_4] : memref<400x256xbf16, #tpu.memory_space<vmem>>, vector<400x256xbf16>
    %cst_5 = arith.constant dense<0.000000e+00> : vector<16x256xf32>
    %4 = tpu.matmul %0, %3, %cst_5 {dimension_numbers = #tpu.dot_dimension_numbers<[1], [0], [0], [1], [0, 0, 1, 1], [], []>} : vector<16x400xbf16>, vector<400x256xbf16>, vector<16x256xf32> -> vector<16x256xf32>
    %5 = arith.mulf %2, %2 : vector<16x256xf32>
    %6 = arith.mulf %4, %4 : vector<16x256xf32>
    %7 = arith.addf %5, %6 : vector<16x256xf32>
    %c0_6 = arith.constant 0 : index
    %c0_7 = arith.constant 0 : index
    %8 = vector.load %arg4[%c0_6, %c0_7] : memref<256x128xf32, #tpu.memory_space<vmem>>, vector<256x128xf32>
    %cst_8 = arith.constant dense<0.000000e+00> : vector<16x128xf32>
    %9 = tpu.matmul %7, %8, %cst_8 {dimension_numbers = #tpu.dot_dimension_numbers<[1], [0], [0], [1], [0, 0, 1, 1], [], []>} : vector<16x256xf32>, vector<256x128xf32>, vector<16x128xf32> -> vector<16x128xf32>
    %cst_9 = arith.constant 1.1920929E-7 : f32
    %10 = vector.broadcast %cst_9 : f32 to vector<16x128xf32>
    %11 = arith.maximumf %9, %10 : vector<16x128xf32>
    %12 = math.log %11 : vector<16x128xf32>
    %c0_10 = arith.constant 0 : index
    %c0_11 = arith.constant 0 : index
    %13 = vector.load %arg5[%c0_10, %c0_11] : memref<16x128xf32, #tpu.memory_space<vmem>>, vector<16x128xf32>
    tpu.vector_store %arg5[%c0_10, %c0_11], %12 {strides = array<i32>} : memref<16x128xf32, #tpu.memory_space<vmem>>, vector<16x128xf32>,
    return
  }
  func.func @transform_0(%arg0: i32) -> (i32, i32) {
    %c0_i32 = arith.constant 0 : i32
    %c0_i32_0 = arith.constant 0 : i32
    return %arg0, %c0_i32 : i32, i32
  }
  func.func @transform_1(%arg0: i32) -> (i32, i32) {
    %c0_i32 = arith.constant 0 : i32
    %c0_i32_0 = arith.constant 0 : i32
    %c0_i32_1 = arith.constant 0 : i32
    return %c0_i32, %c0_i32_0 : i32, i32
  }
  func.func @transform_2(%arg0: i32) -> (i32, i32) {
    %c0_i32 = arith.constant 0 : i32
    %c0_i32_0 = arith.constant 0 : i32
    %c0_i32_1 = arith.constant 0 : i32
    return %c0_i32, %c0_i32_0 : i32, i32
  }
  func.func @transform_3(%arg0: i32) -> (i32, i32) {
    %c0_i32 = arith.constant 0 : i32
    %c0_i32_0 = arith.constant 0 : i32
    %c0_i32_1 = arith.constant 0 : i32
    return %c0_i32, %c0_i32_0 : i32, i32
  }
  func.func @transform_4(%arg0: i32) -> (i32, i32) {
    %c0_i32 = arith.constant 0 : i32
    %c0_i32_0 = arith.constant 0 : i32
    return %arg0, %c0_i32 : i32, i32
  }
}

</mosaic_0001>

<llo_original>
// kernel: tpu_custom_call.1
$region0: #{tpu_custom_call.1}
  #allocation0 [shape = 'u32[]', space=smem, size = 0x4, offset = 0x4, fixed_abs, tag = 'smem constant byte address 0x4 - core index']
  #allocation1 [shape = 'u32[144,128]{1,0:T(1,128)}', space=vmem, size = 0x12000, scoped, tag = 'internal scratch']
  %s0 = inlined_call_operand.hbm [shape: bf16[16,400], index: 0, kind: input, shape index: {}]
  %s1 = inlined_call_operand.hbm [shape: bf16[400,256], index: 1, kind: input, shape index: {}]
  %s2 = inlined_call_operand.hbm [shape: bf16[400,256], index: 2, kind: input, shape index: {}]
  %s3 = inlined_call_operand.hbm [shape: f32[256,128], index: 3, kind: input, shape index: {}]
  %s4 = inlined_call_operand.hbm [shape: f32[16,128], index: 4, kind: output, shape index: {}]
  %s5 = sld [smem:[#allocation0]]
  $region42: #{tpu_custom_call.1} parent=0
    _
  %s7 = ssub.s32 1, %s5
  %s8 = scalar_select 0, %s7, %s5
  $region1: #{tpu_custom_call.1} parent=0
    #allocation2 [shape = 'u8[16384]{0}', space=vmem, size = 0x4000, scoped, tag = 'input window, operand 0, single buffered']
    #allocation3 [shape = 's32[1]{0}', space=sflag, size = 0x4, scoped, tag = 'scoped memory for tpu_custom_call.1']
    #allocation4 [shape = 's32[1]{0}', space=sflag, size = 0x4, scoped, tag = 'scoped memory for tpu_custom_call.1']
    #allocation5 [shape = 'u8[204800]{0}', space=vmem, size = 0x32000, scoped, tag = 'input window, operand 1, single buffered']
    #allocation6 [shape = 's32[1]{0}', space=sflag, size = 0x4, scoped, tag = 'scoped memory for tpu_custom_call.1']
    #allocation7 [shape = 'u8[204800]{0}', space=vmem, size = 0x32000, scoped, tag = 'input window, operand 2, single buffered']
    #allocation8 [shape = 'u8[131072]{0}', space=vmem, size = 0x20000, scoped, tag = 'input window, operand 3, single buffered']
    #allocation9 [shape = 's32[1]{0}', space=sflag, size = 0x4, scoped, tag = 'scoped memory for tpu_custom_call.1']
    #allocation10 [shape = 'u8[8192]{0}', space=vmem, size = 0x2000, scoped, tag = 'output window, operand 0, single buffered']
    %9 = vsyncpa [#allocation3], 0
    %10 = vsyncpa [#allocation6], 0
    %11 = vsyncpa [#allocation9], 0
    %12 = vsyncpa [#allocation4], 0
    // Predicated region
    $region2: #{tpu_custom_call.1} parent=1 // pred_check
      _
    $region3: #{tpu_custom_call.1} parent=1 // pred_check_branch
      %14 = sbr.rel (0) target = $region5
    $region4: #{tpu_custom_call.1} parent=1 // pred_region
      %s16 = ssub.s32 512, 512
      %17 = vsyncadd [#allocation3], %s16
      %s18 = sshll.u32 [#allocation2], 4
      %s19 = int_to_ptr.vmem [resolvable:$true] %s18
      %24 = dma.hbm_to_vmem [thread:$0]  %s0, 512, %s19, [#allocation3], 256, 256, 16
    $region5: #{tpu_custom_call.1} parent=1 // pred_fallthru
      _
    // Predicated region
    $region6: #{tpu_custom_call.1} parent=1 // pred_check
      _
    $region7: #{tpu_custom_call.1} parent=1 // pred_check_branch
      %26 = sbr.rel (0) target = $region9
    $region8: #{tpu_custom_call.1} parent=1 // pred_region
      %s28 = ssub.s32 6400, 6400
      %29 = vsyncadd [#allocation6], %s28
      %s30 = sshll.u32 [#allocation5], 4
      %s31 = int_to_ptr.vmem [resolvable:$true] %s30
      %36 = dma.hbm_to_vmem [thread:$0]  %s1, 6400, %s31, [#allocation6], 128, 128, 8
    $region9: #{tpu_custom_call.1} parent=1 // pred_fallthru
      _
    // Predicated region
    $region10: #{tpu_custom_call.1} parent=1 // pred_check
      _
    $region11: #{tpu_custom_call.1} parent=1 // pred_check_branch
      %38 = sbr.rel (0) target = $region13
    $region12: #{tpu_custom_call.1} parent=1 // pred_region
      %s40 = ssub.s32 6400, 6400
      %41 = vsyncadd [#allocation6], %s40
      %s42 = sshll.u32 [#allocation7], 4
      %s43 = int_to_ptr.vmem [resolvable:$true] %s42
      %48 = dma.hbm_to_vmem [thread:$0]  %s2, 6400, %s43, [#allocation6], 128, 128, 8
    $region13: #{tpu_custom_call.1} parent=1 // pred_fallthru
      _
    // Predicated region
    $region14: #{tpu_custom_call.1} parent=1 // pred_check
      _
    $region15: #{tpu_custom_call.1} parent=1 // pred_check_branch
      %50 = sbr.rel (0) target = $region17
    $region16: #{tpu_custom_call.1} parent=1 // pred_region
      %s52 = ssub.s32 4096, 4096
      %53 = vsyncadd [#allocation9], %s52
      %s54 = sshll.u32 [#allocation8], 4
      %s55 = int_to_ptr.vmem [resolvable:$true] %s54
      %60 = dma.hbm_to_vmem [thread:$0]  %s3, 4096, %s55, [#allocation9], 128, 128, 8
    $region17: #{tpu_custom_call.1} parent=1 // pred_fallthru
      _
    // Predicated region
    $region18: #{tpu_custom_call.1} parent=1 // pred_check
      _
    $region19: #{tpu_custom_call.1} parent=1 // pred_check_branch
      %62 = sbr.rel (0) target = $region21
    $region20: #{tpu_custom_call.1} parent=1 // pred_region
      %63 = dma.done [#allocation3], 512
    $region21: #{tpu_custom_call.1} parent=1 // pred_fallthru
      _
    // Predicated region
    $region22: #{tpu_custom_call.1} parent=1 // pred_check
      _
    $region23: #{tpu_custom_call.1} parent=1 // pred_check_branch
      %65 = sbr.rel (0) target = $region25
    $region24: #{tpu_custom_call.1} parent=1 // pred_region
      %66 = dma.done [#allocation6], 6400
    $region25: #{tpu_custom_call.1} parent=1 // pred_fallthru
      _
    // Predicated region
    $region26: #{tpu_custom_call.1} parent=1 // pred_check
      _
    $region27: #{tpu_custom_call.1} parent=1 // pred_check_branch
      %68 = sbr.rel (0) target = $region29
    $region28: #{tpu_custom_call.1} parent=1 // pred_region
      %69 = dma.done [#allocation6], 6400
    $region29: #{tpu_custom_call.1} parent=1 // pred_fallthru
      _
    // Predicated region
    $region30: #{tpu_custom_call.1} parent=1 // pred_check
      _
    $region31: #{tpu_custom_call.1} parent=1 // pred_check_branch
      %71 = sbr.rel (0) target = $region33
    $region32: #{tpu_custom_call.1} parent=1 // pred_region
      %72 = dma.done [#allocation9], 4096
    $region33: #{tpu_custom_call.1} parent=1 // pred_fallthru
      _
    %v74 = vld [vmem:[#allocation2] sm:$0xff]
    %v75 = vld [vmem:[#allocation2 + $0x8] sm:$0xff]
    %v76 = vld [vmem:[#allocation2 + $0x10] sm:$0xff]
    %v77 = vld [vmem:[#allocation2 + $0x18] sm:$0xff]
    %v78 = vld [vmem:[#allocation5] sm:$0xff]
    %v79 = vld [vmem:[#allocation5 + $0x8] sm:$0xff]
    %v80 = vld [vmem:[#allocation5 + $0x10] sm:$0xff]
    %v81 = vld [vmem:[#allocation5 + $0x18] sm:$0xff]
    %v82 = vld [vmem:[#allocation5 + $0x20] sm:$0xff]
    %v83 = vld [vmem:[#allocation5 + $0x28] sm:$0xff]
    %v84 = vld [vmem:[#allocation5 + $0x30] sm:$0xff]
    %v85 = vld [vmem:[#allocation5 + $0x38] sm:$0xff]
    %v86 = vld [vmem:[#allocation5 + $0x40] sm:$0xff]
    %v87 = vld [vmem:[#allocation5 + $0x48] sm:$0xff]
    %v88 = vld [vmem:[#allocation5 + $0x50] sm:$0xff]
    %v89 = vld [vmem:[#allocation5 + $0x58] sm:$0xff]
    %v90 = vld [vmem:[#allocation5 + $0x60] sm:$0xff]
    %v91 = vld [vmem:[#allocation5 + $0x68] sm:$0xff]
    %v92 = vld [vmem:[#allocation5 + $0x70] sm:$0xff]
    %v93 = vld [vmem:[#allocation5 + $0x78] sm:$0xff]
    %v94 = vld [vmem:[#allocation5 + $0x80] sm:$0xff]
    %v95 = vld [vmem:[#allocation5 + $0x88] sm:$0xff]
    %v96 = vld [vmem:[#allocation5 + $0x90] sm:$0xff]
    %v97 = vld [vmem:[#allocation5 + $0x98] sm:$0xff]
    %v98 = vld [vmem:[#allocation5 + $0xa0] sm:$0xff]
    %v99 = vld [vmem:[#allocation5 + $0xa8] sm:$0xff]
    %v100 = vld [vmem:[#allocation5 + $0xb0] sm:$0xff]
    %v101 = vld [vmem:[#allocation5 + $0xb8] sm:$0xff]
    %v102 = vld [vmem:[#allocation5 + $0xc0] sm:$0xff]
    %v103 = vld [vmem:[#allocation5 + $0xc8] sm:$0xff]
    %v104 = vld [vmem:[#allocation5 + $0xd0] sm:$0xff]
    %v105 = vld [vmem:[#allocation5 + $0xd8] sm:$0xff]
    %v106 = vld [vmem:[#allocation5 + $0xe0] sm:$0xff]
    %v107 = vld [vmem:[#allocation5 + $0xe8] sm:$0xff]
    %v108 = vld [vmem:[#allocation5 + $0xf0] sm:$0xff]
    %v109 = vld [vmem:[#allocation5 + $0xf8] sm:$0xff]
    %v110 = vld [vmem:[#allocation5 + $0x100] sm:$0xff]
    %v111 = vld [vmem:[#allocation5 + $0x108] sm:$0xff]
    %v112 = vld [vmem:[#allocation5 + $0x110] sm:$0xff]
    %v113 = vld [vmem:[#allocation5 + $0x118] sm:$0xff]
    %v114 = vld [vmem:[#allocation5 + $0x120] sm:$0xff]
    %v115 = vld [vmem:[#allocation5 + $0x128] sm:$0xff]
    %v116 = vld [vmem:[#allocation5 + $0x130] sm:$0xff]
    %v117 = vld [vmem:[#allocation5 + $0x138] sm:$0xff]
    %v118 = vld [vmem:[#allocation5 + $0x140] sm:$0xff]
    %v119 = vld [vmem:[#allocation5 + $0x148] sm:$0xff]
    %v120 = vld [vmem:[#allocation5 + $0x150] sm:$0xff]
    %v121 = vld [vmem:[#allocation5 + $0x158] sm:$0xff]
    %v122 = vld [vmem:[#allocation5 + $0x160] sm:$0xff]
    %v123 = vld [vmem:[#allocation5 + $0x168] sm:$0xff]
    %v124 = vld [vmem:[#allocation5 + $0x170] sm:$0xff]
    %v125 = vld [vmem:[#allocation5 + $0x178] sm:$0xff]
    %v126 = vld [vmem:[#allocation5 + $0x180] sm:$0xff]
    %v127 = vld [vmem:[#allocation5 + $0x188] sm:$0xff]
    %v132 = vunpack.c.l.b16 %v74
    %v133 = vunpack.c.h.b16 %v74
    %v134 = vunpack.c.l.b16 %v75
    %v135 = vunpack.c.h.b16 %v75
    %v136 = vunpack.c.l.b16 %v76
    %v137 = vunpack.c.h.b16 %v76
    %v138 = vunpack.c.l.b16 %v77
    %v139 = vunpack.c.h.b16 %v77
    %v140 = vpack.c.b16 %v136, %v132
    %v141 = vpack.c.b16 %v137, %v133
    %v142 = vpack.c.b16 %v138, %v134
    %v143 = vpack.c.b16 %v139, %v135
    %v197 = vunpack.c.l.b16 %v78
    %v198 = vunpack.c.h.b16 %v78
    %v199 = vunpack.c.l.b16 %v79
    %v200 = vunpack.c.h.b16 %v79
    %v201 = vunpack.c.l.b16 %v80
    %v202 = vunpack.c.h.b16 %v80
    %v203 = vunpack.c.l.b16 %v81
    %v204 = vunpack.c.h.b16 %v81
    %v205 = vunpack.c.l.b16 %v82
    %v206 = vunpack.c.h.b16 %v82
    %v207 = vunpack.c.l.b16 %v83
    %v208 = vunpack.c.h.b16 %v83
    %v209 = vunpack.c.l.b16 %v84
    %v210 = vunpack.c.h.b16 %v84
    %v211 = vunpack.c.l.b16 %v85
    %v212 = vunpack.c.h.b16 %v85
    %v213 = vunpack.c.l.b16 %v86
    %v214 = vunpack.c.h.b16 %v86
    %v215 = vunpack.c.l.b16 %v87
    %v216 = vunpack.c.h.b16 %v87
    %v217 = vunpack.c.l.b16 %v88
    %v218 = vunpack.c.h.b16 %v88
    %v219 = vunpack.c.l.b16 %v89
    %v220 = vunpack.c.h.b16 %v89
    %v221 = vunpack.c.l.b16 %v90
    %v222 = vunpack.c.h.b16 %v90
    %v223 = vunpack.c.l.b16 %v91
    %v224 = vunpack.c.h.b16 %v91
    %v225 = vunpack.c.l.b16 %v92
    %v226 = vunpack.c.h.b16 %v92
    %v227 = vunpack.c.l.b16 %v93
    %v228 = vunpack.c.h.b16 %v93
    %v229 = vunpack.c.l.b16 %v94
    %v230 = vunpack.c.h.b16 %v94
    %v231 = vunpack.c.l.b16 %v95
    %v232 = vunpack.c.h.b16 %v95
    %v233 = vunpack.c.l.b16 %v96
    %v234 = vunpack.c.h.b16 %v96
    %v235 = vunpack.c.l.b16 %v97
    %v236 = vunpack.c.h.b16 %v97
    %v237 = vunpack.c.l.b16 %v98
    %v238 = vunpack.c.h.b16 %v98
    %v239 = vunpack.c.l.b16 %v99
    %v240 = vunpack.c.h.b16 %v99
    %v241 = vunpack.c.l.b16 %v100
    %v242 = vunpack.c.h.b16 %v100
    %v243 = vunpack.c.l.b16 %v101
    %v244 = vunpack.c.h.b16 %v101
    %v245 = vunpack.c.l.b16 %v102
    %v246 = vunpack.c.h.b16 %v102
    %v247 = vunpack.c.l.b16 %v103
    %v248 = vunpack.c.h.b16 %v103
    %v249 = vunpack.c.l.b16 %v104
    %v250 = vunpack.c.h.b16 %v104
    %v251 = vunpack.c.l.b16 %v105
    %v252 = vunpack.c.h.b16 %v105
    %v253 = vunpack.c.l.b16 %v106
    %v254 = vunpack.c.h.b16 %v106
    %v255 = vunpack.c.l.b16 %v107
    %v256 = vunpack.c.h.b16 %v107
    %v257 = vunpack.c.l.b16 %v108
    %v258 = vunpack.c.h.b16 %v108
    %v259 = vunpack.c.l.b16 %v109
    %v260 = vunpack.c.h.b16 %v109
    %v261 = vunpack.c.l.b16 %v110
    %v262 = vunpack.c.h.b16 %v110
    %v263 = vunpack.c.l.b16 %v111
    %v264 = vunpack.c.h.b16 %v111
    %v265 = vunpack.c.l.b16 %v112
    %v266 = vunpack.c.h.b16 %v112
    %v267 = vunpack.c.l.b16 %v113
    %v268 = vunpack.c.h.b16 %v113
    %v269 = vunpack.c.l.b16 %v114
    %v270 = vunpack.c.h.b16 %v114
    %v271 = vunpack.c.l.b16 %v115
    %v272 = vunpack.c.h.b16 %v115
    %v273 = vunpack.c.l.b16 %v116
    %v274 = vunpack.c.h.b16 %v116
    %v275 = vunpack.c.l.b16 %v117
    %v276 = vunpack.c.h.b16 %v117
    %v277 = vunpack.c.l.b16 %v118
    %v278 = vunpack.c.h.b16 %v118
    %v279 = vunpack.c.l.b16 %v119
    %v280 = vunpack.c.h.b16 %v119
    %v281 = vunpack.c.l.b16 %v120
    %v282 = vunpack.c.h.b16 %v120
    %v283 = vunpack.c.l.b16 %v121
    %v284 = vunpack.c.h.b16 %v121
    %v285 = vunpack.c.l.b16 %v122
    %v286 = vunpack.c.h.b16 %v122
    %v287 = vunpack.c.l.b16 %v123
    %v288 = vunpack.c.h.b16 %v123
    %v289 = vunpack.c.l.b16 %v124
    %v290 = vunpack.c.h.b16 %v124
    %v291 = vunpack.c.l.b16 %v125
    %v292 = vunpack.c.h.b16 %v125
    %v293 = vunpack.c.l.b16 %v126
    %v294 = vunpack.c.h.b16 %v126
    %v295 = vunpack.c.l.b16 %v127
    %v296 = vunpack.c.h.b16 %v127
    %v297 = vpack.c.b16 %v199, %v197
    %v298 = vpack.c.b16 %v200, %v198
    %v299 = vpack.c.b16 %v203, %v201
    %v300 = vpack.c.b16 %v204, %v202
    %v301 = vpack.c.b16 %v207, %v205
    %v302 = vpack.c.b16 %v208, %v206
    %v303 = vpack.c.b16 %v211, %v209
    %v304 = vpack.c.b16 %v212, %v210
    %v305 = vpack.c.b16 %v215, %v213
    %v306 = vpack.c.b16 %v216, %v214
    %v307 = vpack.c.b16 %v219, %v217
    %v308 = vpack.c.b16 %v220, %v218
    %v309 = vpack.c.b16 %v223, %v221
    %v310 = vpack.c.b16 %v224, %v222
    %v311 = vpack.c.b16 %v227, %v225
    %v312 = vpack.c.b16 %v228, %v226
    %v313 = vpack.c.b16 %v231, %v229
    %v314 = vpack.c.b16 %v232, %v230
    %v315 = vpack.c.b16 %v235, %v233
    %v316 = vpack.c.b16 %v236, %v234
    %v317 = vpack.c.b16 %v239, %v237
    %v318 = vpack.c.b16 %v240, %v238
    %v319 = vpack.c.b16 %v243, %v241
    %v320 = vpack.c.b16 %v244, %v242
    %v321 = vpack.c.b16 %v247, %v245
    %v322 = vpack.c.b16 %v248, %v246
    %v323 = vpack.c.b16 %v251, %v249
    %v324 = vpack.c.b16 %v252, %v250
    %v325 = vpack.c.b16 %v255, %v253
    %v326 = vpack.c.b16 %v256, %v254
    %v327 = vpack.c.b16 %v259, %v257
    %v328 = vpack.c.b16 %v260, %v258
    %v329 = vpack.c.b16 %v263, %v261
    %v330 = vpack.c.b16 %v264, %v262
    %v331 = vpack.c.b16 %v267, %v265
    %v332 = vpack.c.b16 %v268, %v266
    %v333 = vpack.c.b16 %v271, %v269
    %v334 = vpack.c.b16 %v272, %v270
    %v335 = vpack.c.b16 %v275, %v273
    %v336 = vpack.c.b16 %v276, %v274
    %v337 = vpack.c.b16 %v279, %v277
    %v338 = vpack.c.b16 %v280, %v278
    %v339 = vpack.c.b16 %v283, %v281
    %v340 = vpack.c.b16 %v284, %v282
    %v341 = vpack.c.b16 %v287, %v285
    %v342 = vpack.c.b16 %v288, %v286
    %v343 = vpack.c.b16 %v291, %v289
    %v344 = vpack.c.b16 %v292, %v290
    %v345 = vpack.c.b16 %v295, %v293
    %v346 = vpack.c.b16 %v296, %v294
    %vm397 = vcmask 130048
    %v399 = vsel %vm397, %v143, 0
    %401 = vmatprep.subr.bf16.mxu0 %v298
    %402 = vmatpush1.bf16.msra.mxu0 %v297
    %403 = vmatprep.subr.bf16.mxu0 %v300
    %404 = vmatpush1.bf16.msra.mxu0 %v299
    %405 = vmatprep.subr.bf16.mxu0 %v302
    %406 = vmatpush1.bf16.msra.mxu0 %v301
    %407 = vmatprep.subr.bf16.mxu0 %v304
    %408 = vmatpush1.bf16.msra.mxu0 %v303
    %409 = vmatprep.subr.bf16.mxu0 %v306
    %410 = vmatpush1.bf16.msra.mxu0 %v305
    %411 = vmatprep.subr.bf16.mxu0 %v308
    %412 = vmatpush1.bf16.msra.mxu0 %v307
    %413 = vmatprep.subr.bf16.mxu0 %v310
    %414 = vmatpush1.bf16.msra.mxu0 %v309
    %415 = vmatprep.subr.bf16.mxu0 %v312
    %416 = vmatpush1.bf16.msra.mxu0 %v311
    %417 = vmatprep.subr.bf16.mxu0 %v314
    %418 = vmatpush1.bf16.msra.mxu0 %v313
    %419 = vmatprep.subr.bf16.mxu0 %v316
    %420 = vmatpush1.bf16.msra.mxu0 %v315
    %421 = vmatprep.subr.bf16.mxu0 %v318
    %422 = vmatpush1.bf16.msra.mxu0 %v317
    %423 = vmatprep.subr.bf16.mxu0 %v320
    %424 = vmatpush1.bf16.msra.mxu0 %v319
    %425 = vmatprep.subr.bf16.mxu0 %v322
    %426 = vmatpush1.bf16.msra.mxu0 %v321
    %427 = vmatprep.subr.bf16.mxu0 %v324
    %428 = vmatpush1.bf16.msra.mxu0 %v323
    %429 = vmatprep.subr.bf16.mxu0 %v326
    %430 = vmatpush1.bf16.msra.mxu0 %v325
    %431 = vmatprep.subr.bf16.mxu0 %v328
    %432 = vmatpush1.bf16.msra.mxu0 %v327
    %433 = vmatprep.mubr.bf16.mxu0 %v141
    %434 = vmatmul.mubr.bf16.gmra.mrb[0].mxu0 %v140
    %v435 = vpop.f32.mrb[0].mxu0
    %v436 = vadd.f32 0.0, %v435
    %v437 = vpop.f32.mrb[0].mxu0
    %v438 = vadd.f32 0.0, %v437
    %v439 = vpop.f32.mrb[0].mxu0
    %v440 = vadd.f32 0.0, %v439
    %v441 = vpop.f32.mrb[0].mxu0
    %v442 = vadd.f32 0.0, %v441
    %443 = vdwg.mxu0
    %444 = vmatprep.subr.bf16.mxu0 %v330
    %445 = vmatpush1.bf16.msra.mxu0 %v329
    %446 = vmatprep.subr.bf16.mxu0 %v332
    %447 = vmatpush1.bf16.msra.mxu0 %v331
    %448 = vmatprep.subr.bf16.mxu0 %v334
    %449 = vmatpush1.bf16.msra.mxu0 %v333
    %450 = vmatprep.subr.bf16.mxu0 %v336
    %451 = vmatpush1.bf16.msra.mxu0 %v335
    %452 = vmatprep.subr.bf16.mxu0 %v338
    %453 = vmatpush1.bf16.msra.mxu0 %v337
    %454 = vmatprep.subr.bf16.mxu0 %v340
    %455 = vmatpush1.bf16.msra.mxu0 %v339
    %456 = vmatprep.subr.bf16.mxu0 %v342
    %457 = vmatpush1.bf16.msra.mxu0 %v341
    %458 = vmatprep.subr.bf16.mxu0 %v344
    %459 = vmatpush1.bf16.msra.mxu0 %v343
    %460 = vmatprep.subr.bf16.mxu0 %v346
    %461 = vmatpush1.bf16.msra.mxu0 %v345
    %462 = vmatprep.subr.bf16.mxu0 0
    %463 = vmatpush1.bf16.msra.mxu0 0
    %464 = vmatprep.subr.bf16.mxu0 0
    %465 = vmatpush1.bf16.msra.mxu0 0
    %466 = vmatprep.subr.bf16.mxu0 0
    %467 = vmatpush1.bf16.msra.mxu0 0
    %468 = vmatprep.subr.bf16.mxu0 0
    %469 = vmatpush1.bf16.msra.mxu0 0
    %470 = vmatprep.subr.bf16.mxu0 0
    %471 = vmatpush1.bf16.msra.mxu0 0
    %472 = vmatprep.subr.bf16.mxu0 0
    %473 = vmatpush1.bf16.msra.mxu0 0
    %474 = vmatprep.subr.bf16.mxu0 0
    %475 = vmatpush1.bf16.msra.mxu0 0
    %476 = vmatprep.mubr.bf16.mxu0 %v399
    %477 = vmatmul.mubr.bf16.gmra.mrb[0].mxu0 %v142
    %v478 = vpop.f32.mrb[0].mxu0
    %v479 = vadd.f32 %v436, %v478
    %v480 = vpop.f32.mrb[0].mxu0
    %v481 = vadd.f32 %v438, %v480
    %v482 = vpop.f32.mrb[0].mxu0
    %v483 = vadd.f32 %v440, %v482
    %v484 = vpop.f32.mrb[0].mxu0
    %v485 = vadd.f32 %v442, %v484
    %486 = vdwg.mxu0
    %v487 = vld [vmem:[#allocation7] sm:$0xff]
    %v488 = vld [vmem:[#allocation7 + $0x8] sm:$0xff]
    %v489 = vld [vmem:[#allocation7 + $0x10] sm:$0xff]
    %v490 = vld [vmem:[#allocation7 + $0x18] sm:$0xff]
    %v491 = vld [vmem:[#allocation7 + $0x20] sm:$0xff]
    %v492 = vld [vmem:[#allocation7 + $0x28] sm:$0xff]
    %v493 = vld [vmem:[#allocation7 + $0x30] sm:$0xff]
    %v494 = vld [vmem:[#allocation7 + $0x38] sm:$0xff]
    %v495 = vld [vmem:[#allocation7 + $0x40] sm:$0xff]
    %v496 = vld [vmem:[#allocation7 + $0x48] sm:$0xff]
    %v497 = vld [vmem:[#allocation7 + $0x50] sm:$0xff]
    %v498 = vld [vmem:[#allocation7 + $0x58] sm:$0xff]
    %v499 = vld [vmem:[#allocation7 + $0x60] sm:$0xff]
    %v500 = vld [vmem:[#allocation7 + $0x68] sm:$0xff]
    %v501 = vld [vmem:[#allocation7 + $0x70] sm:$0xff]
    %v502 = vld [vmem:[#allocation7 + $0x78] sm:$0xff]
    %v503 = vld [vmem:[#allocation7 + $0x80] sm:$0xff]
    %v504 = vld [vmem:[#allocation7 + $0x88] sm:$0xff]
    %v505 = vld [vmem:[#allocation7 + $0x90] sm:$0xff]
    %v506 = vld [vmem:[#allocation7 + $0x98] sm:$0xff]
    %v507 = vld [vmem:[#allocation7 + $0xa0] sm:$0xff]
    %v508 = vld [vmem:[#allocation7 + $0xa8] sm:$0xff]
    %v509 = vld [vmem:[#allocation7 + $0xb0] sm:$0xff]
    %v510 = vld [vmem:[#allocation7 + $0xb8] sm:$0xff]
    %v511 = vld [vmem:[#allocation7 + $0xc0] sm:$0xff]
    %v512 = vld [vmem:[#allocation7 + $0xc8] sm:$0xff]
    %v513 = vld [vmem:[#allocation7 + $0xd0] sm:$0xff]
    %v514 = vld [vmem:[#allocation7 + $0xd8] sm:$0xff]
    %v515 = vld [vmem:[#allocation7 + $0xe0] sm:$0xff]
    %v516 = vld [vmem:[#allocation7 + $0xe8] sm:$0xff]
    %v517 = vld [vmem:[#allocation7 + $0xf0] sm:$0xff]
    %v518 = vld [vmem:[#allocation7 + $0xf8] sm:$0xff]
    %v519 = vld [vmem:[#allocation7 + $0x100] sm:$0xff]
    %v520 = vld [vmem:[#allocation7 + $0x108] sm:$0xff]
    %v521 = vld [vmem:[#allocation7 + $0x110] sm:$0xff]
    %v522 = vld [vmem:[#allocation7 + $0x118] sm:$0xff]
    %v523 = vld [vmem:[#allocation7 + $0x120] sm:$0xff]
    %v524 = vld [vmem:[#allocation7 + $0x128] sm:$0xff]
    %v525 = vld [vmem:[#allocation7 + $0x130] sm:$0xff]
    %v526 = vld [vmem:[#allocation7 + $0x138] sm:$0xff]
    %v527 = vld [vmem:[#allocation7 + $0x140] sm:$0xff]
    %v528 = vld [vmem:[#allocation7 + $0x148] sm:$0xff]
    %v529 = vld [vmem:[#allocation7 + $0x150] sm:$0xff]
    %v530 = vld [vmem:[#allocation7 + $0x158] sm:$0xff]
    %v531 = vld [vmem:[#allocation7 + $0x160] sm:$0xff]
    %v532 = vld [vmem:[#allocation7 + $0x168] sm:$0xff]
    %v533 = vld [vmem:[#allocation7 + $0x170] sm:$0xff]
    %v534 = vld [vmem:[#allocation7 + $0x178] sm:$0xff]
    %v535 = vld [vmem:[#allocation7 + $0x180] sm:$0xff]
    %v536 = vld [vmem:[#allocation7 + $0x188] sm:$0xff]
    %v587 = vunpack.c.l.b16 %v487
    %v588 = vunpack.c.h.b16 %v487
    %v589 = vunpack.c.l.b16 %v488
    %v590 = vunpack.c.h.b16 %v488
    %v591 = vunpack.c.l.b16 %v489
    %v592 = vunpack.c.h.b16 %v489
    %v593 = vunpack.c.l.b16 %v490
    %v594 = vunpack.c.h.b16 %v490
    %v595 = vunpack.c.l.b16 %v491
    %v596 = vunpack.c.h.b16 %v491
    %v597 = vunpack.c.l.b16 %v492
    %v598 = vunpack.c.h.b16 %v492
    %v599 = vunpack.c.l.b16 %v493
    %v600 = vunpack.c.h.b16 %v493
    %v601 = vunpack.c.l.b16 %v494
    %v602 = vunpack.c.h.b16 %v494
    %v603 = vunpack.c.l.b16 %v495
    %v604 = vunpack.c.h.b16 %v495
    %v605 = vunpack.c.l.b16 %v496
    %v606 = vunpack.c.h.b16 %v496
    %v607 = vunpack.c.l.b16 %v497
    %v608 = vunpack.c.h.b16 %v497
    %v609 = vunpack.c.l.b16 %v498
    %v610 = vunpack.c.h.b16 %v498
    %v611 = vunpack.c.l.b16 %v499
    %v612 = vunpack.c.h.b16 %v499
    %v613 = vunpack.c.l.b16 %v500
    %v614 = vunpack.c.h.b16 %v500
    %v615 = vunpack.c.l.b16 %v501
    %v616 = vunpack.c.h.b16 %v501
    %v617 = vunpack.c.l.b16 %v502
    %v618 = vunpack.c.h.b16 %v502
    %v619 = vunpack.c.l.b16 %v503
    %v620 = vunpack.c.h.b16 %v503
    %v621 = vunpack.c.l.b16 %v504
    %v622 = vunpack.c.h.b16 %v504
    %v623 = vunpack.c.l.b16 %v505
    %v624 = vunpack.c.h.b16 %v505
    %v625 = vunpack.c.l.b16 %v506
    %v626 = vunpack.c.h.b16 %v506
    %v627 = vunpack.c.l.b16 %v507
    %v628 = vunpack.c.h.b16 %v507
    %v629 = vunpack.c.l.b16 %v508
    %v630 = vunpack.c.h.b16 %v508
    %v631 = vunpack.c.l.b16 %v509
    %v632 = vunpack.c.h.b16 %v509
    %v633 = vunpack.c.l.b16 %v510
    %v634 = vunpack.c.h.b16 %v510
    %v635 = vunpack.c.l.b16 %v511
    %v636 = vunpack.c.h.b16 %v511
    %v637 = vunpack.c.l.b16 %v512
    %v638 = vunpack.c.h.b16 %v512
    %v639 = vunpack.c.l.b16 %v513
    %v640 = vunpack.c.h.b16 %v513
    %v641 = vunpack.c.l.b16 %v514
    %v642 = vunpack.c.h.b16 %v514
    %v643 = vunpack.c.l.b16 %v515
    %v644 = vunpack.c.h.b16 %v515
    %v645 = vunpack.c.l.b16 %v516
    %v646 = vunpack.c.h.b16 %v516
    %v647 = vunpack.c.l.b16 %v517
    %v648 = vunpack.c.h.b16 %v517
    %v649 = vunpack.c.l.b16 %v518
    %v650 = vunpack.c.h.b16 %v518
    %v651 = vunpack.c.l.b16 %v519
    %v652 = vunpack.c.h.b16 %v519
    %v653 = vunpack.c.l.b16 %v520
    %v654 = vunpack.c.h.b16 %v520
    %v655 = vunpack.c.l.b16 %v521
    %v656 = vunpack.c.h.b16 %v521
    %v657 = vunpack.c.l.b16 %v522
    %v658 = vunpack.c.h.b16 %v522
    %v659 = vunpack.c.l.b16 %v523
    %v660 = vunpack.c.h.b16 %v523
    %v661 = vunpack.c.l.b16 %v524
    %v662 = vunpack.c.h.b16 %v524
    %v663 = vunpack.c.l.b16 %v525
    %v664 = vunpack.c.h.b16 %v525
    %v665 = vunpack.c.l.b16 %v526
    %v666 = vunpack.c.h.b16 %v526
    %v667 = vunpack.c.l.b16 %v527
    %v668 = vunpack.c.h.b16 %v527
    %v669 = vunpack.c.l.b16 %v528
    %v670 = vunpack.c.h.b16 %v528
    %v671 = vunpack.c.l.b16 %v529
    %v672 = vunpack.c.h.b16 %v529
    %v673 = vunpack.c.l.b16 %v530
    %v674 = vunpack.c.h.b16 %v530
    %v675 = vunpack.c.l.b16 %v531
    %v676 = vunpack.c.h.b16 %v531
    %v677 = vunpack.c.l.b16 %v532
    %v678 = vunpack.c.h.b16 %v532
    %v679 = vunpack.c.l.b16 %v533
    %v680 = vunpack.c.h.b16 %v533
    %v681 = vunpack.c.l.b16 %v534
    %v682 = vunpack.c.h.b16 %v534
    %v683 = vunpack.c.l.b16 %v535
    %v684 = vunpack.c.h.b16 %v535
    %v685 = vunpack.c.l.b16 %v536
    %v686 = vunpack.c.h.b16 %v536
    %v687 = vpack.c.b16 %v589, %v587
    %v688 = vpack.c.b16 %v590, %v588
    %v689 = vpack.c.b16 %v593, %v591
    %v690 = vpack.c.b16 %v594, %v592
    %v691 = vpack.c.b16 %v597, %v595
    %v692 = vpack.c.b16 %v598, %v596
    %v693 = vpack.c.b16 %v601, %v599
    %v694 = vpack.c.b16 %v602, %v600
    %v695 = vpack.c.b16 %v605, %v603
    %v696 = vpack.c.b16 %v606, %v604
    %v697 = vpack.c.b16 %v609, %v607
    %v698 = vpack.c.b16 %v610, %v608
    %v699 = vpack.c.b16 %v613, %v611
    %v700 = vpack.c.b16 %v614, %v612
    %v701 = vpack.c.b16 %v617, %v615
    %v702 = vpack.c.b16 %v618, %v616
    %v703 = vpack.c.b16 %v621, %v619
    %v704 = vpack.c.b16 %v622, %v620
    %v705 = vpack.c.b16 %v625, %v623
    %v706 = vpack.c.b16 %v626, %v624
    %v707 = vpack.c.b16 %v629, %v627
    %v708 = vpack.c.b16 %v630, %v628
    %v709 = vpack.c.b16 %v633, %v631
    %v710 = vpack.c.b16 %v634, %v632
    %v711 = vpack.c.b16 %v637, %v635
    %v712 = vpack.c.b16 %v638, %v636
    %v713 = vpack.c.b16 %v641, %v639
    %v714 = vpack.c.b16 %v642, %v640
    %v715 = vpack.c.b16 %v645, %v643
    %v716 = vpack.c.b16 %v646, %v644
    %v717 = vpack.c.b16 %v649, %v647
    %v718 = vpack.c.b16 %v650, %v648
    %v719 = vpack.c.b16 %v653, %v651
    %v720 = vpack.c.b16 %v654, %v652
    %v721 = vpack.c.b16 %v657, %v655
    %v722 = vpack.c.b16 %v658, %v656
    %v723 = vpack.c.b16 %v661, %v659
    %v724 = vpack.c.b16 %v662, %v660
    %v725 = vpack.c.b16 %v665, %v663
    %v726 = vpack.c.b16 %v666, %v664
    %v727 = vpack.c.b16 %v669, %v667
    %v728 = vpack.c.b16 %v670, %v668
    %v729 = vpack.c.b16 %v673, %v671
    %v730 = vpack.c.b16 %v674, %v672
    %v731 = vpack.c.b16 %v677, %v675
    %v732 = vpack.c.b16 %v678, %v676
    %v733 = vpack.c.b16 %v681, %v679
    %v734 = vpack.c.b16 %v682, %v680
    %v735 = vpack.c.b16 %v685, %v683
    %v736 = vpack.c.b16 %v686, %v684
    %787 = vmatprep.subr.bf16.mxu0 %v688
    %788 = vmatpush1.bf16.msra.mxu0 %v687
    %789 = vmatprep.subr.bf16.mxu0 %v690
    %790 = vmatpush1.bf16.msra.mxu0 %v689
    %791 = vmatprep.subr.bf16.mxu0 %v692
    %792 = vmatpush1.bf16.msra.mxu0 %v691
    %793 = vmatprep.subr.bf16.mxu0 %v694
    %794 = vmatpush1.bf16.msra.mxu0 %v693
    %795 = vmatprep.subr.bf16.mxu0 %v696
    %796 = vmatpush1.bf16.msra.mxu0 %v695
    %797 = vmatprep.subr.bf16.mxu0 %v698
    %798 = vmatpush1.bf16.msra.mxu0 %v697
    %799 = vmatprep.subr.bf16.mxu0 %v700
    %800 = vmatpush1.bf16.msra.mxu0 %v699
    %801 = vmatprep.subr.bf16.mxu0 %v702
    %802 = vmatpush1.bf16.msra.mxu0 %v701
    %803 = vmatprep.subr.bf16.mxu0 %v704
    %804 = vmatpush1.bf16.msra.mxu0 %v703
    %805 = vmatprep.subr.bf16.mxu0 %v706
    %806 = vmatpush1.bf16.msra.mxu0 %v705
    %807 = vmatprep.subr.bf16.mxu0 %v708
    %808 = vmatpush1.bf16.msra.mxu0 %v707
    %809 = vmatprep.subr.bf16.mxu0 %v710
    %810 = vmatpush1.bf16.msra.mxu0 %v709
    %811 = vmatprep.subr.bf16.mxu0 %v712
    %812 = vmatpush1.bf16.msra.mxu0 %v711
    %813 = vmatprep.subr.bf16.mxu0 %v714
    %814 = vmatpush1.bf16.msra.mxu0 %v713
    %815 = vmatprep.subr.bf16.mxu0 %v716
    %816 = vmatpush1.bf16.msra.mxu0 %v715
    %817 = vmatprep.subr.bf16.mxu0 %v718
    %818 = vmatpush1.bf16.msra.mxu0 %v717
    %819 = vmatprep.mubr.bf16.mxu0 %v141
    %820 = vmatmul.mubr.bf16.gmra.mrb[0].mxu0 %v140
    %v821 = vpop.f32.mrb[0].mxu0
    %v822 = vadd.f32 0.0, %v821
    %v823 = vpop.f32.mrb[0].mxu0
    %v824 = vadd.f32 0.0, %v823
    %v825 = vpop.f32.mrb[0].mxu0
    %v826 = vadd.f32 0.0, %v825
    %v827 = vpop.f32.mrb[0].mxu0
    %v828 = vadd.f32 0.0, %v827
    %829 = vdwg.mxu0
    %830 = vmatprep.subr.bf16.mxu0 %v720
    %831 = vmatpush1.bf16.msra.mxu0 %v719
    %832 = vmatprep.subr.bf16.mxu0 %v722
    %833 = vmatpush1.bf16.msra.mxu0 %v721
    %834 = vmatprep.subr.bf16.mxu0 %v724
    %835 = vmatpush1.bf16.msra.mxu0 %v723
    %836 = vmatprep.subr.bf16.mxu0 %v726
    %837 = vmatpush1.bf16.msra.mxu0 %v725
    %838 = vmatprep.subr.bf16.mxu0 %v728
    %839 = vmatpush1.bf16.msra.mxu0 %v727
    %840 = vmatprep.subr.bf16.mxu0 %v730
    %841 = vmatpush1.bf16.msra.mxu0 %v729
    %842 = vmatprep.subr.bf16.mxu0 %v732
    %843 = vmatpush1.bf16.msra.mxu0 %v731
    %844 = vmatprep.subr.bf16.mxu0 %v734
    %845 = vmatpush1.bf16.msra.mxu0 %v733
    %846 = vmatprep.subr.bf16.mxu0 %v736
    %847 = vmatpush1.bf16.msra.mxu0 %v735
    %848 = vmatprep.subr.bf16.mxu0 0
    %849 = vmatpush1.bf16.msra.mxu0 0
    %850 = vmatprep.subr.bf16.mxu0 0
    %851 = vmatpush1.bf16.msra.mxu0 0
    %852 = vmatprep.subr.bf16.mxu0 0
    %853 = vmatpush1.bf16.msra.mxu0 0
    %854 = vmatprep.subr.bf16.mxu0 0
    %855 = vmatpush1.bf16.msra.mxu0 0
    %856 = vmatprep.subr.bf16.mxu0 0
    %857 = vmatpush1.bf16.msra.mxu0 0
    %858 = vmatprep.subr.bf16.mxu0 0
    %859 = vmatpush1.bf16.msra.mxu0 0
    %860 = vmatprep.subr.bf16.mxu0 0
    %861 = vmatpush1.bf16.msra.mxu0 0
    %862 = vmatprep.mubr.bf16.mxu0 %v399
    %863 = vmatmul.mubr.bf16.gmra.mrb[0].mxu0 %v142
    %v864 = vpop.f32.mrb[0].mxu0
    %v865 = vadd.f32 %v822, %v864
    %v866 = vpop.f32.mrb[0].mxu0
    %v867 = vadd.f32 %v824, %v866
    %v868 = vpop.f32.mrb[0].mxu0
    %v869 = vadd.f32 %v826, %v868
    %v870 = vpop.f32.mrb[0].mxu0
    %v871 = vadd.f32 %v828, %v870
    %872 = vdwg.mxu0
    %v873 = vmul.f32 %v479, %v479
    %v874 = vmul.f32 %v481, %v481
    %v875 = vmul.f32 %v483, %v483
    %v876 = vmul.f32 %v485, %v485
    %v877 = vmul.f32 %v865, %v865
    %v878 = vmul.f32 %v867, %v867
    %v879 = vmul.f32 %v869, %v869
    %v880 = vmul.f32 %v871, %v871
    %v881 = vadd.f32 %v873, %v877
    %v882 = vadd.f32 %v874, %v878
    %v883 = vadd.f32 %v875, %v879
    %v884 = vadd.f32 %v876, %v880
    %v885 = vld [vmem:[#allocation8] sm:$0xff]
    %v886 = vld [vmem:[#allocation8 + $0x8] sm:$0xff]
    %v887 = vld [vmem:[#allocation8 + $0x10] sm:$0xff]
    %v888 = vld [vmem:[#allocation8 + $0x18] sm:$0xff]
    %v889 = vld [vmem:[#allocation8 + $0x20] sm:$0xff]
    %v890 = vld [vmem:[#allocation8 + $0x28] sm:$0xff]
    %v891 = vld [vmem:[#allocation8 + $0x30] sm:$0xff]
    %v892 = vld [vmem:[#allocation8 + $0x38] sm:$0xff]
    %v893 = vld [vmem:[#allocation8 + $0x40] sm:$0xff]
    %v894 = vld [vmem:[#allocation8 + $0x48] sm:$0xff]
    %v895 = vld [vmem:[#allocation8 + $0x50] sm:$0xff]
    %v896 = vld [vmem:[#allocation8 + $0x58] sm:$0xff]
    %v897 = vld [vmem:[#allocation8 + $0x60] sm:$0xff]
    %v898 = vld [vmem:[#allocation8 + $0x68] sm:$0xff]
    %v899 = vld [vmem:[#allocation8 + $0x70] sm:$0xff]
    %v900 = vld [vmem:[#allocation8 + $0x78] sm:$0xff]
    %v901 = vld [vmem:[#allocation8 + $0x80] sm:$0xff]
    %v902 = vld [vmem:[#allocation8 + $0x88] sm:$0xff]
    %v903 = vld [vmem:[#allocation8 + $0x90] sm:$0xff]
    %v904 = vld [vmem:[#allocation8 + $0x98] sm:$0xff]
    %v905 = vld [vmem:[#allocation8 + $0xa0] sm:$0xff]
    %v906 = vld [vmem:[#allocation8 + $0xa8] sm:$0xff]
    %v907 = vld [vmem:[#allocation8 + $0xb0] sm:$0xff]
    %v908 = vld [vmem:[#allocation8 + $0xb8] sm:$0xff]
    %v909 = vld [vmem:[#allocation8 + $0xc0] sm:$0xff]
    %v910 = vld [vmem:[#allocation8 + $0xc8] sm:$0xff]
    %v911 = vld [vmem:[#allocation8 + $0xd0] sm:$0xff]
    %v912 = vld [vmem:[#allocation8 + $0xd8] sm:$0xff]
    %v913 = vld [vmem:[#allocation8 + $0xe0] sm:$0xff]
    %v914 = vld [vmem:[#allocation8 + $0xe8] sm:$0xff]
    %v915 = vld [vmem:[#allocation8 + $0xf0] sm:$0xff]
    %v916 = vld [vmem:[#allocation8 + $0xf8] sm:$0xff]
    %917 = vmatprep.subr.mxu0 0.0
    %918 = vmatpush1.msra.mxu0 %v885
    %919 = vmatprep.subr.mxu0 0.0
    %920 = vmatpush1.msra.mxu0 %v886
    %921 = vmatprep.subr.mxu0 0.0
    %922 = vmatpush1.msra.mxu0 %v887
    %923 = vmatprep.subr.mxu0 0.0
    %924 = vmatpush1.msra.mxu0 %v888
    %925 = vmatprep.subr.mxu0 0.0
    %926 = vmatpush1.msra.mxu0 %v889
    %927 = vmatprep.subr.mxu0 0.0
    %928 = vmatpush1.msra.mxu0 %v890
    %929 = vmatprep.subr.mxu0 0.0
    %930 = vmatpush1.msra.mxu0 %v891
    %931 = vmatprep.subr.mxu0 0.0
    %932 = vmatpush1.msra.mxu0 %v892
    %933 = vmatprep.subr.mxu0 0.0
    %934 = vmatpush1.msra.mxu0 %v893
    %935 = vmatprep.subr.mxu0 0.0
    %936 = vmatpush1.msra.mxu0 %v894
    %937 = vmatprep.subr.mxu0 0.0
    %938 = vmatpush1.msra.mxu0 %v895
    %939 = vmatprep.subr.mxu0 0.0
    %940 = vmatpush1.msra.mxu0 %v896
    %941 = vmatprep.subr.mxu0 0.0
    %942 = vmatpush1.msra.mxu0 %v897
    %943 = vmatprep.subr.mxu0 0.0
    %944 = vmatpush1.msra.mxu0 %v898
    %945 = vmatprep.subr.mxu0 0.0
    %946 = vmatpush1.msra.mxu0 %v899
    %947 = vmatprep.subr.mxu0 0.0
    %948 = vmatpush1.msra.mxu0 %v900
    %949 = vmatprep.subr.mxu0 0.0
    %950 = vmatpush1.msra.mxu0 %v901
    %951 = vmatprep.subr.mxu0 0.0
    %952 = vmatpush1.msra.mxu0 %v902
    %953 = vmatprep.subr.mxu0 0.0
    %954 = vmatpush1.msra.mxu0 %v903
    %955 = vmatprep.subr.mxu0 0.0
    %956 = vmatpush1.msra.mxu0 %v904
    %957 = vmatprep.subr.mxu0 0.0
    %958 = vmatpush1.msra.mxu0 %v905
    %959 = vmatprep.subr.mxu0 0.0
    %960 = vmatpush1.msra.mxu0 %v906
    %961 = vmatprep.subr.mxu0 0.0
    %962 = vmatpush1.msra.mxu0 %v907
    %963 = vmatprep.subr.mxu0 0.0
    %964 = vmatpush1.msra.mxu0 %v908
    %965 = vmatprep.subr.mxu0 0.0
    %966 = vmatpush1.msra.mxu0 %v909
    %967 = vmatprep.subr.mxu0 0.0
    %968 = vmatpush1.msra.mxu0 %v910
    %969 = vmatprep.subr.mxu0 0.0
    %970 = vmatpush1.msra.mxu0 %v911
    %971 = vmatprep.subr.mxu0 0.0
    %972 = vmatpush1.msra.mxu0 %v912
    %973 = vmatprep.subr.mxu0 0.0
    %974 = vmatpush1.msra.mxu0 %v913
    %975 = vmatprep.subr.mxu0 0.0
    %976 = vmatpush1.msra.mxu0 %v914
    %977 = vmatprep.subr.mxu0 0.0
    %978 = vmatpush1.msra.mxu0 %v915
    %979 = vmatprep.subr.mxu0 0.0
    %980 = vmatpush1.msra.mxu0 %v916
    %981 = vmatprep.mubr.f32.mxu0 %v882
    %982 = vmatmul.mubr.f32.gmra.mrb[0].mxu0 %v881
    %v983 = vpop.f32.mrb[0].mxu0
    %v984 = vadd.f32 0.0, %v983
    %v985 = vpop.f32.mrb[0].mxu0
    %986 = vmatprep.mubr.f32.mxu0 %v884
    %987 = vmatmul.mubr.f32.gmra.mrb[0].mxu0 %v883
    %v988 = vpop.f32.mrb[0].mxu0
    %v989 = vadd.f32 0.0, %v988
    %v990 = vpop.f32.mrb[0].mxu0
    %991 = vdwg.mxu0
    %v992 = vmax.f32 %v984, 1.1920929e-07
    %v993 = vmax.f32 %v989, 1.1920929e-07
    %v994 = vlog2.pop %v992
    %v995 = vmul.f32 %v994, 0.6931472
    %v996 = vlog2.pop %v993
    %v997 = vmul.f32 %v996, 0.6931472
    %998 = vst [vmem:[#allocation10] sm:$0xff] %v995
    %999 = vst [vmem:[#allocation10 + $0x8] sm:$0xff] %v997
    // Predicated region
    $region34: #{tpu_custom_call.1} parent=1 // pred_check
      _
    $region35: #{tpu_custom_call.1} parent=1 // pred_check_branch
      %1001 = sbr.rel (0) target = $region37
    $region36: #{tpu_custom_call.1} parent=1 // pred_region
      %s1003 = ssub.s32 256, 256
      %1004 = vsyncadd [#allocation4], %s1003
      %s1005 = sshll.u32 [#allocation10], 4
      %s1006 = int_to_ptr.vmem [resolvable:$true] %s1005
      %1011 = dma.vmem_to_hbm [thread:$0]  %s1006, 256, %s4, [#allocation4], 128, 128, 8
    $region37: #{tpu_custom_call.1} parent=1 // pred_fallthru
      _
    // Predicated region
    $region38: #{tpu_custom_call.1} parent=1 // pred_check
      _
    $region39: #{tpu_custom_call.1} parent=1 // pred_check_branch
      %1013 = sbr.rel (0) target = $region41
    $region40: #{tpu_custom_call.1} parent=1 // pred_region
      %1014 = dma.done [#allocation4], 256
    $region41: #{tpu_custom_call.1} parent=1 // pred_fallthru
      _
    %1015 = vsyncpa [#allocation3], 1
    %1016 = vsyncpa [#allocation6], 1
    %1017 = vsyncpa [#allocation9], 1
    %1018 = vsyncpa [#allocation4], 1

</llo_original>
